<compile_context>
chip_gen: v5e
topology: v5e:2x2
jax: 0.10.0
libtpu: 0.0.40
codegen_flags: <defaults>
</compile_context>

<pallas_src>
import numpy as np

import jax
import jax.numpy as jnp
from jax import lax
from jax.experimental import pallas as pl
from jax.experimental.pallas import tpu as pltpu


# ----------------------------------------------------------------------------
# Fused BasicBlock kernel
# ----------------------------------------------------------------------------
def _make_basic_block_kernel(n, c, h, w, k_pad, eps=1e-5):
    hw = h * w
    l = n * hw                          # flattened batch*spatial length (lanes)
    taps = [(dy, dx) for dy in (-1, 0, 1) for dx in (-1, 0, 1)]

    def kernel(x_ref, masks_ref, w1_ref, w2_ref, bn_ref, o_ref, patches_ref):
        # Gather the batch into one lane-dense (C, N*H*W) slab (stays in VMEM).
        x = jnp.concatenate([x_ref[i] for i in range(n)], axis=-1)      # (c, l)

        # Zero the scratch once: rows 9c..k_pad stay zero (their weight columns
        # are zero too, but uninitialized VMEM could hold NaNs and NaN*0=NaN).
        patches_ref[...] = jnp.zeros_like(patches_ref)

        def conv3x3(act, wmat_ref):
            # im2col: one shifted + edge-masked copy per tap -> (9c, l) matrix.
            for t, (dy, dx) in enumerate(taps):
                s = dy * w + dx
                shifted = act if s == 0 else jnp.roll(act, -s, axis=1)
                patches_ref[t * c:(t + 1) * c, :] = (
                    shifted * masks_ref[t:t + 1, :])
            # Single MXU matmul per conv: (m_pad, k_pad) @ (k_pad, l).
            out = jnp.dot(wmat_ref[...], patches_ref[...],
                          preferred_element_type=jnp.float32)
            return out[:c, :]                                           # (c, l)

        def batchnorm(y, gamma, beta):
            # Training-mode BN: biased batch stats over N,H,W (= lane axis).
            inv = 1.0 / float(l)
            mean = jnp.sum(y, axis=1, keepdims=True) * inv              # (c, 1)
            cen = y - mean
            var = jnp.sum(cen * cen, axis=1, keepdims=True) * inv
            return cen * (gamma * lax.rsqrt(var + eps)) + beta

        g1, b1 = bn_ref[:, 0:1], bn_ref[:, 1:2]
        g2, b2 = bn_ref[:, 2:3], bn_ref[:, 3:4]

        y = jnp.maximum(batchnorm(conv3x3(x, w1_ref), g1, b1), 0.0)     # stage 1
        y = batchnorm(conv3x3(y, w2_ref), g2, b2)                       # stage 2
        out = jnp.maximum(y + x, 0.0)                                   # +res, ReLU

        # Lane-dense stores back to the (N, C, H*W) output layout.
        for i in range(n):
            o_ref[i] = out[:, i * hw:(i + 1) * hw]

    return kernel


# ----------------------------------------------------------------------------
# Host-side helpers
# ----------------------------------------------------------------------------
def _tap_masks(n, h, w):
    """(9, N*H*W) f32 validity masks implementing padding=1 for each 3x3 tap."""
    hw = h * w
    pos = np.arange(n * hw)
    hh = (pos % hw) // w
    ww = pos % w
    rows = []
    for dy in (-1, 0, 1):
        for dx in (-1, 0, 1):
            ok = (hh + dy >= 0) & (hh + dy < h) & (ww + dx >= 0) & (ww + dx < w)
            rows.append(ok.astype(np.float32))
    return np.stack(rows, axis=0)


def _pack_conv_weight(w_oihw, m_pad, k_pad):
    """(Cout, Cin, 3, 3) -> zero-padded (m_pad, k_pad) im2col weight matrix.

    Column index k = (dy*3 + dx) * Cin + ci, matching the kernel's patch rows.
    """
    cout, cin, kh, kw = w_oihw.shape
    wm = jnp.transpose(w_oihw, (2, 3, 1, 0)).reshape(kh * kw * cin, cout)
    wm = jnp.transpose(wm, (1, 0))                                  # (cout, 9*cin)
    return jnp.pad(wm, ((0, m_pad - cout), (0, k_pad - kh * kw * cin)))


# ----------------------------------------------------------------------------
# Public forward
# ----------------------------------------------------------------------------
@jax.jit
def basic_block_forward(x_nchw, params):
    n, c, h, w = x_nchw.shape
    hw, l = h * w, n * h * w
    k_pad = ((9 * c + 7) // 8) * 8           # sublane-aligned im2col K
    m_pad = max(8, ((c + 7) // 8) * 8)       # sublane-aligned matmul M

    # Free reshape: NCHW -> (N, C, H*W) keeps HBM layout lane-dense (trailing 256).
    x_flat = x_nchw.reshape(n, c, hw).astype(jnp.float32)
    masks = jnp.asarray(_tap_masks(n, h, w))           # static, baked at trace time
    w1 = _pack_conv_weight(params["w1_oihw"], m_pad, k_pad)
    w2 = _pack_conv_weight(params["w2_oihw"], m_pad, k_pad)
    bn = jnp.stack([params["gamma1"], params["beta1"],
                    params["gamma2"], params["beta2"]], axis=1)         # (c, 4)

    kernel = _make_basic_block_kernel(n, c, h, w, k_pad)
    out_flat = pl.pallas_call(
        kernel,
        out_shape=jax.ShapeDtypeStruct((n, c, hw), jnp.float32),
        grid=(1,),
        in_specs=[
            pl.BlockSpec((n, c, hw), lambda i: (0, 0, 0)),     # x
            pl.BlockSpec((9, l), lambda i: (0, 0)),            # tap masks
            pl.BlockSpec((m_pad, k_pad), lambda i: (0, 0)),    # conv1 weights
            pl.BlockSpec((m_pad, k_pad), lambda i: (0, 0)),    # conv2 weights
            pl.BlockSpec((c, 4), lambda i: (0, 0)),            # BN gamma/beta x2
        ],
        out_specs=pl.BlockSpec((n, c, hw), lambda i: (0, 0, 0)),
        scratch_shapes=[pltpu.VMEM((k_pad, l), jnp.float32)],  # im2col patches
        compiler_params=pltpu.CompilerParams(
            dimension_semantics=("arbitrary",)),
    )(x_flat, masks, w1, w2, bn)
    return out_flat.reshape(n, c, h, w)


# ----------------------------------------------------------------------------
# Parameter init (PyTorch-like shapes; non-trivial BN affine to exercise math)
# ----------------------------------------------------------------------------
def init_params(key, in_planes, planes):
    k1, k2, k3, k4, k5, k6 = jax.random.split(key, 6)
    b1 = 1.0 / np.sqrt(in_planes * 9)
    b2 = 1.0 / np.sqrt(planes * 9)
    return {
        "w1_oihw": jax.random.uniform(k1, (planes, in_planes, 3, 3),
                                      jnp.float32, -b1, b1),
        "w2_oihw": jax.random.uniform(k2, (planes, planes, 3, 3),
                                      jnp.float32, -b2, b2),
        "gamma1": jax.random.uniform(k3, (planes,), jnp.float32, 0.5, 1.5),
        "beta1": 0.1 * jax.random.normal(k4, (planes,), jnp.float32),
        "gamma2": jax.random.uniform(k5, (planes,), jnp.float32, 0.5, 1.5),
        "beta2": 0.1 * jax.random.normal(k6, (planes,), jnp.float32),
    }


# ----------------------------------------------------------------------------
# Pure-JAX reference (training-mode BN, matches PyTorch BasicBlock forward)
# ----------------------------------------------------------------------------
def reference_forward(x_nchw, params, eps=1e-5):
    def conv(x, w_oihw):
        return lax.conv_general_dilated(
            x, w_oihw, window_strides=(1, 1), padding=((1, 1), (1, 1)),
            dimension_numbers=("NCHW", "OIHW", "NCHW"))

    def bn(x, gamma, beta):
        mean = jnp.mean(x, axis=(0, 2, 3), keepdims=True)
        var = jnp.var(x, axis=(0, 2, 3), keepdims=True)   # biased, like PyTorch
        xn = (x - mean) * lax.rsqrt(var + eps)
        return xn * gamma.reshape(1, -1, 1, 1) + beta.reshape(1, -1, 1, 1)

    y = conv(x_nchw, params["w1_oihw"])
    y = jax.nn.relu(bn(y, params["gamma1"], params["beta1"]))
    y = conv(y, params["w2_oihw"])
    y = bn(y, params["gamma2"], params["beta2"])
    return jax.nn.relu(y + x_nchw)


# ----------------------------------------------------------------------------
if __name__ == "__main__":
    key = jax.random.PRNGKey(0)
    kx, kp = jax.random.split(key)

    N, C, H, W = 2, 4, 16, 16              # in_planes == planes, stride=1
    x = jax.random.normal(kx, (N, C, H, W), jnp.float32)
    params = init_params(kp, in_planes=C, planes=C)

    out = jax.block_until_ready(basic_block_forward(x, params))
    ref = jax.block_until_ready(reference_forward(x, params))

    assert out.shape == ref.shape == (N, C, H, W)
    err = float(jnp.max(jnp.abs(out - ref)))
    assert err < 1e-3, f"mismatch vs reference: max abs err = {err}"
    print("KERNEL_OK")
</pallas_src>

<mosaic_0001>
module attributes {stable_mosaic.version = 11 : i64} {
  func.func @kernel(%arg0: i32, %arg1: memref<2x4x256xf32, #tpu.memory_space<vmem>>, %arg2: memref<9x512xf32, #tpu.memory_space<vmem>>, %arg3: memref<8x40xf32, #tpu.memory_space<vmem>>, %arg4: memref<8x40xf32, #tpu.memory_space<vmem>>, %arg5: memref<4x4xf32, #tpu.memory_space<vmem>>, %arg6: memref<2x4x256xf32, #tpu.memory_space<vmem>>, %arg7: memref<40x512xf32, #tpu.memory_space<vmem>>) attributes {dimension_semantics = [#tpu.dimension_semantics<arbitrary>], iteration_bounds = array<i64: 1>, scalar_prefetch = 0 : i64, scratch_operands = 1 : i64, tpu.core_type = #tpu.core_type<tc>, window_params = [{pipeline_mode = #tpu.pipeline_mode<synchronous>, transform_indices = @transform_0, window_bounds = array<i64: 2, 4, 256>}, {pipeline_mode = #tpu.pipeline_mode<synchronous>, transform_indices = @transform_1, window_bounds = array<i64: 9, 512>}, {pipeline_mode = #tpu.pipeline_mode<synchronous>, transform_indices = @transform_2, window_bounds = array<i64: 8, 40>}, {pipeline_mode = #tpu.pipeline_mode<synchronous>, transform_indices = @transform_3, window_bounds = array<i64: 8, 40>}, {pipeline_mode = #tpu.pipeline_mode<synchronous>, transform_indices = @transform_4, window_bounds = array<i64: 4, 4>}, {pipeline_mode = #tpu.pipeline_mode<synchronous>, transform_indices = @transform_5, window_bounds = array<i64: 2, 4, 256>}]} {
    %c0 = arith.constant 0 : index
    %c0_0 = arith.constant 0 : index
    %c0_1 = arith.constant 0 : index
    %0 = vector.load %arg1[%c0, %c0_0, %c0_1] : memref<2x4x256xf32, #tpu.memory_space<vmem>>, vector<1x4x256xf32>
    %1 = vector.shape_cast %0 : vector<1x4x256xf32> to vector<4x256xf32>
    %c1 = arith.constant 1 : index
    %c0_2 = arith.constant 0 : index
    %c0_3 = arith.constant 0 : index
    %2 = vector.load %arg1[%c1, %c0_2, %c0_3] : memref<2x4x256xf32, #tpu.memory_space<vmem>>, vector<1x4x256xf32>
    %3 = vector.shape_cast %2 : vector<1x4x256xf32> to vector<4x256xf32>
    %4 = tpu.concatenate %1, %3 in 1 : vector<4x256xf32>, vector<4x256xf32> -> vector<4x512xf32>
    %cst = arith.constant 0.000000e+00 : f32
    %5 = vector.broadcast %cst : f32 to vector<40x512xf32>
    %c0_4 = arith.constant 0 : index
    %c0_5 = arith.constant 0 : index
    %6 = vector.load %arg7[%c0_4, %c0_5] : memref<40x512xf32, #tpu.memory_space<vmem>>, vector<40x512xf32>
    tpu.vector_store %arg7[%c0_4, %c0_5], %5 {strides = array<i32>} : memref<40x512xf32, #tpu.memory_space<vmem>>, vector<40x512xf32>,
    %c0_6 = arith.constant 0 : index
    %c0_7 = arith.constant 0 : index
    %7 = vector.load %arg5[%c0_6, %c0_7] : memref<4x4xf32, #tpu.memory_space<vmem>>, vector<4x1xf32>
    %c0_8 = arith.constant 0 : index
    %c1_9 = arith.constant 1 : index
    %8 = vector.load %arg5[%c0_8, %c1_9] : memref<4x4xf32, #tpu.memory_space<vmem>>, vector<4x1xf32>
    %c0_10 = arith.constant 0 : index
    %c2 = arith.constant 2 : index
    %9 = vector.load %arg5[%c0_10, %c2] : memref<4x4xf32, #tpu.memory_space<vmem>>, vector<4x1xf32>
    %c0_11 = arith.constant 0 : index
    %c3 = arith.constant 3 : index
    %10 = vector.load %arg5[%c0_11, %c3] : memref<4x4xf32, #tpu.memory_space<vmem>>, vector<4x1xf32>
    %11 = vector.extract_strided_slice %4 {offsets = [0, 495], sizes = [4, 17], strides = [1, 1]} : vector<4x512xf32> to vector<4x17xf32>
    %12 = vector.extract_strided_slice %4 {offsets = [0, 0], sizes = [4, 495], strides = [1, 1]} : vector<4x512xf32> to vector<4x495xf32>
    %13 = tpu.concatenate %11, %12 in 1 : vector<4x17xf32>, vector<4x495xf32> -> vector<4x512xf32>
    %c0_12 = arith.constant 0 : index
    %c0_13 = arith.constant 0 : index
    %14 = vector.load %arg2[%c0_12, %c0_13] : memref<9x512xf32, #tpu.memory_space<vmem>>, vector<1x512xf32>
    %15 = vector.broadcast %14 : vector<1x512xf32> to vector<4x512xf32>
    %16 = arith.mulf %13, %15 : vector<4x512xf32>
    %c0_14 = arith.constant 0 : index
    %c0_15 = arith.constant 0 : index
    %17 = vector.load %arg7[%c0_14, %c0_15] : memref<40x512xf32, #tpu.memory_space<vmem>>, vector<4x512xf32>
    tpu.vector_store %arg7[%c0_14, %c0_15], %16 {strides = array<i32>} : memref<40x512xf32, #tpu.memory_space<vmem>>, vector<4x512xf32>,
    %18 = vector.extract_strided_slice %4 {offsets = [0, 496], sizes = [4, 16], strides = [1, 1]} : vector<4x512xf32> to vector<4x16xf32>
    %19 = vector.extract_strided_slice %4 {offsets = [0, 0], sizes = [4, 496], strides = [1, 1]} : vector<4x512xf32> to vector<4x496xf32>
    %20 = tpu.concatenate %18, %19 in 1 : vector<4x16xf32>, vector<4x496xf32> -> vector<4x512xf32>
    %c1_16 = arith.constant 1 : index
    %c0_17 = arith.constant 0 : index
    %21 = vector.load %arg2[%c1_16, %c0_17] : memref<9x512xf32, #tpu.memory_space<vmem>>, vector<1x512xf32>
    %22 = vector.broadcast %21 : vector<1x512xf32> to vector<4x512xf32>
    %23 = arith.mulf %20, %22 : vector<4x512xf32>
    %c4 = arith.constant 4 : index
    %c0_18 = arith.constant 0 : index
    %24 = vector.load %arg7[%c4, %c0_18] : memref<40x512xf32, #tpu.memory_space<vmem>>, vector<4x512xf32>
    tpu.vector_store %arg7[%c4, %c0_18], %23 {strides = array<i32>} : memref<40x512xf32, #tpu.memory_space<vmem>>, vector<4x512xf32>,
    %25 = vector.extract_strided_slice %4 {offsets = [0, 497], sizes = [4, 15], strides = [1, 1]} : vector<4x512xf32> to vector<4x15xf32>
    %26 = vector.extract_strided_slice %4 {offsets = [0, 0], sizes = [4, 497], strides = [1, 1]} : vector<4x512xf32> to vector<4x497xf32>
    %27 = tpu.concatenate %25, %26 in 1 : vector<4x15xf32>, vector<4x497xf32> -> vector<4x512xf32>
    %c2_19 = arith.constant 2 : index
    %c0_20 = arith.constant 0 : index
    %28 = vector.load %arg2[%c2_19, %c0_20] : memref<9x512xf32, #tpu.memory_space<vmem>>, vector<1x512xf32>
    %29 = vector.broadcast %28 : vector<1x512xf32> to vector<4x512xf32>
    %30 = arith.mulf %27, %29 : vector<4x512xf32>
    %c8 = arith.constant 8 : index
    %c0_21 = arith.constant 0 : index
    %31 = vector.load %arg7[%c8, %c0_21] : memref<40x512xf32, #tpu.memory_space<vmem>>, vector<4x512xf32>
    tpu.vector_store %arg7[%c8, %c0_21], %30 {strides = array<i32>} : memref<40x512xf32, #tpu.memory_space<vmem>>, vector<4x512xf32>,
    %32 = vector.extract_strided_slice %4 {offsets = [0, 511], sizes = [4, 1], strides = [1, 1]} : vector<4x512xf32> to vector<4x1xf32>
    %33 = vector.extract_strided_slice %4 {offsets = [0, 0], sizes = [4, 511], strides = [1, 1]} : vector<4x512xf32> to vector<4x511xf32>
    %34 = tpu.concatenate %32, %33 in 1 : vector<4x1xf32>, vector<4x511xf32> -> vector<4x512xf32>
    %c3_22 = arith.constant 3 : index
    %c0_23 = arith.constant 0 : index
    %35 = vector.load %arg2[%c3_22, %c0_23] : memref<9x512xf32, #tpu.memory_space<vmem>>, vector<1x512xf32>
    %36 = vector.broadcast %35 : vector<1x512xf32> to vector<4x512xf32>
    %37 = arith.mulf %34, %36 : vector<4x512xf32>
    %c12 = arith.constant 12 : index
    %c0_24 = arith.constant 0 : index
    %38 = vector.load %arg7[%c12, %c0_24] : memref<40x512xf32, #tpu.memory_space<vmem>>, vector<4x512xf32>
    tpu.vector_store %arg7[%c12, %c0_24], %37 {strides = array<i32>} : memref<40x512xf32, #tpu.memory_space<vmem>>, vector<4x512xf32>,
    %c4_25 = arith.constant 4 : index
    %c0_26 = arith.constant 0 : index
    %39 = vector.load %arg2[%c4_25, %c0_26] : memref<9x512xf32, #tpu.memory_space<vmem>>, vector<1x512xf32>
    %40 = vector.broadcast %39 : vector<1x512xf32> to vector<4x512xf32>
    %41 = arith.mulf %4, %40 : vector<4x512xf32>
    %c16 = arith.constant 16 : index
    %c0_27 = arith.constant 0 : index
    %42 = vector.load %arg7[%c16, %c0_27] : memref<40x512xf32, #tpu.memory_space<vmem>>, vector<4x512xf32>
    tpu.vector_store %arg7[%c16, %c0_27], %41 {strides = array<i32>} : memref<40x512xf32, #tpu.memory_space<vmem>>, vector<4x512xf32>,
    %43 = vector.extract_strided_slice %4 {offsets = [0, 1], sizes = [4, 511], strides = [1, 1]} : vector<4x512xf32> to vector<4x511xf32>
    %44 = vector.extract_strided_slice %4 {offsets = [0, 0], sizes = [4, 1], strides = [1, 1]} : vector<4x512xf32> to vector<4x1xf32>
    %45 = tpu.concatenate %43, %44 in 1 : vector<4x511xf32>, vector<4x1xf32> -> vector<4x512xf32>
    %c5 = arith.constant 5 : index
    %c0_28 = arith.constant 0 : index
    %46 = vector.load %arg2[%c5, %c0_28] : memref<9x512xf32, #tpu.memory_space<vmem>>, vector<1x512xf32>
    %47 = vector.broadcast %46 : vector<1x512xf32> to vector<4x512xf32>
    %48 = arith.mulf %45, %47 : vector<4x512xf32>
    %c20 = arith.constant 20 : index
    %c0_29 = arith.constant 0 : index
    %49 = vector.load %arg7[%c20, %c0_29] : memref<40x512xf32, #tpu.memory_space<vmem>>, vector<4x512xf32>
    tpu.vector_store %arg7[%c20, %c0_29], %48 {strides = array<i32>} : memref<40x512xf32, #tpu.memory_space<vmem>>, vector<4x512xf32>,
    %50 = vector.extract_strided_slice %4 {offsets = [0, 15], sizes = [4, 497], strides = [1, 1]} : vector<4x512xf32> to vector<4x497xf32>
    %51 = vector.extract_strided_slice %4 {offsets = [0, 0], sizes = [4, 15], strides = [1, 1]} : vector<4x512xf32> to vector<4x15xf32>
    %52 = tpu.concatenate %50, %51 in 1 : vector<4x497xf32>, vector<4x15xf32> -> vector<4x512xf32>
    %c6 = arith.constant 6 : index
    %c0_30 = arith.constant 0 : index
    %53 = vector.load %arg2[%c6, %c0_30] : memref<9x512xf32, #tpu.memory_space<vmem>>, vector<1x512xf32>
    %54 = vector.broadcast %53 : vector<1x512xf32> to vector<4x512xf32>
    %55 = arith.mulf %52, %54 : vector<4x512xf32>
    %c24 = arith.constant 24 : index
    %c0_31 = arith.constant 0 : index
    %56 = vector.load %arg7[%c24, %c0_31] : memref<40x512xf32, #tpu.memory_space<vmem>>, vector<4x512xf32>
    tpu.vector_store %arg7[%c24, %c0_31], %55 {strides = array<i32>} : memref<40x512xf32, #tpu.memory_space<vmem>>, vector<4x512xf32>,
    %57 = vector.extract_strided_slice %4 {offsets = [0, 16], sizes = [4, 496], strides = [1, 1]} : vector<4x512xf32> to vector<4x496xf32>
    %58 = vector.extract_strided_slice %4 {offsets = [0, 0], sizes = [4, 16], strides = [1, 1]} : vector<4x512xf32> to vector<4x16xf32>
    %59 = tpu.concatenate %57, %58 in 1 : vector<4x496xf32>, vector<4x16xf32> -> vector<4x512xf32>
    %c7 = arith.constant 7 : index
    %c0_32 = arith.constant 0 : index
    %60 = vector.load %arg2[%c7, %c0_32] : memref<9x512xf32, #tpu.memory_space<vmem>>, vector<1x512xf32>
    %61 = vector.broadcast %60 : vector<1x512xf32> to vector<4x512xf32>
    %62 = arith.mulf %59, %61 : vector<4x512xf32>
    %c28 = arith.constant 28 : index
    %c0_33 = arith.constant 0 : index
    %63 = vector.load %arg7[%c28, %c0_33] : memref<40x512xf32, #tpu.memory_space<vmem>>, vector<4x512xf32>
    tpu.vector_store %arg7[%c28, %c0_33], %62 {strides = array<i32>} : memref<40x512xf32, #tpu.memory_space<vmem>>, vector<4x512xf32>,
    %64 = vector.extract_strided_slice %4 {offsets = [0, 17], sizes = [4, 495], strides = [1, 1]} : vector<4x512xf32> to vector<4x495xf32>
    %65 = vector.extract_strided_slice %4 {offsets = [0, 0], sizes = [4, 17], strides = [1, 1]} : vector<4x512xf32> to vector<4x17xf32>
    %66 = tpu.concatenate %64, %65 in 1 : vector<4x495xf32>, vector<4x17xf32> -> vector<4x512xf32>
    %c8_34 = arith.constant 8 : index
    %c0_35 = arith.constant 0 : index
    %67 = vector.load %arg2[%c8_34, %c0_35] : memref<9x512xf32, #tpu.memory_space<vmem>>, vector<1x512xf32>
    %68 = vector.broadcast %67 : vector<1x512xf32> to vector<4x512xf32>
    %69 = arith.mulf %66, %68 : vector<4x512xf32>
    %c32 = arith.constant 32 : index
    %c0_36 = arith.constant 0 : index
    %70 = vector.load %arg7[%c32, %c0_36] : memref<40x512xf32, #tpu.memory_space<vmem>>, vector<4x512xf32>
    tpu.vector_store %arg7[%c32, %c0_36], %69 {strides = array<i32>} : memref<40x512xf32, #tpu.memory_space<vmem>>, vector<4x512xf32>,
    %c0_37 = arith.constant 0 : index
    %c0_38 = arith.constant 0 : index
    %71 = vector.load %arg3[%c0_37, %c0_38] : memref<8x40xf32, #tpu.memory_space<vmem>>, vector<8x40xf32>
    %c0_39 = arith.constant 0 : index
    %c0_40 = arith.constant 0 : index
    %72 = vector.load %arg7[%c0_39, %c0_40] : memref<40x512xf32, #tpu.memory_space<vmem>>, vector<40x512xf32>
    %cst_41 = arith.constant dense<0.000000e+00> : vector<8x512xf32>
    %73 = tpu.matmul %71, %72, %cst_41 {dimension_numbers = #tpu.dot_dimension_numbers<[1], [0], [0], [1], [0, 0, 1, 1], [], []>} : vector<8x40xf32>, vector<40x512xf32>, vector<8x512xf32> -> vector<8x512xf32>
    %74 = vector.extract_strided_slice %73 {offsets = [0, 0], sizes = [4, 512], strides = [1, 1]} : vector<8x512xf32> to vector<4x512xf32>
    %cst_42 = arith.constant dense<0.000000e+00> : vector<4xf32>
    %75 = vector.multi_reduction <add>, %74, %cst_42 [1] : vector<4x512xf32> to vector<4xf32>
    %76 = vector.shape_cast %75 : vector<4xf32> to vector<4x1xf32>
    %cst_43 = arith.constant 0.001953125 : f32
    %77 = vector.broadcast %cst_43 : f32 to vector<4x1xf32>
    %78 = arith.mulf %76, %77 : vector<4x1xf32>
    %79 = vector.broadcast %78 : vector<4x1xf32> to vector<4x512xf32>
    %80 = arith.subf %74, %79 : vector<4x512xf32>
    %81 = arith.mulf %80, %80 : vector<4x512xf32>
    %cst_44 = arith.constant dense<0.000000e+00> : vector<4xf32>
    %82 = vector.multi_reduction <add>, %81, %cst_44 [1] : vector<4x512xf32> to vector<4xf32>
    %83 = vector.shape_cast %82 : vector<4xf32> to vector<4x1xf32>
    %cst_45 = arith.constant 0.001953125 : f32
    %84 = vector.broadcast %cst_45 : f32 to vector<4x1xf32>
    %85 = arith.mulf %83, %84 : vector<4x1xf32>
    %cst_46 = arith.constant 9.99999974E-6 : f32
    %86 = vector.broadcast %cst_46 : f32 to vector<4x1xf32>
    %87 = arith.addf %85, %86 : vector<4x1xf32>
    %88 = math.rsqrt %87 : vector<4x1xf32>
    %89 = arith.mulf %7, %88 : vector<4x1xf32>
    %90 = vector.broadcast %89 : vector<4x1xf32> to vector<4x512xf32>
    %91 = arith.mulf %80, %90 : vector<4x512xf32>
    %92 = vector.broadcast %8 : vector<4x1xf32> to vector<4x512xf32>
    %93 = arith.addf %91, %92 : vector<4x512xf32>
    %cst_47 = arith.constant 0.000000e+00 : f32
    %94 = vector.broadcast %cst_47 : f32 to vector<4x512xf32>
    %95 = arith.maximumf %93, %94 : vector<4x512xf32>
    %96 = vector.extract_strided_slice %95 {offsets = [0, 495], sizes = [4, 17], strides = [1, 1]} : vector<4x512xf32> to vector<4x17xf32>
    %97 = vector.extract_strided_slice %95 {offsets = [0, 0], sizes = [4, 495], strides = [1, 1]} : vector<4x512xf32> to vector<4x495xf32>
    %98 = tpu.concatenate %96, %97 in 1 : vector<4x17xf32>, vector<4x495xf32> -> vector<4x512xf32>
    %c0_48 = arith.constant 0 : index
    %c0_49 = arith.constant 0 : index
    %99 = vector.load %arg2[%c0_48, %c0_49] : memref<9x512xf32, #tpu.memory_space<vmem>>, vector<1x512xf32>
    %100 = vector.broadcast %99 : vector<1x512xf32> to vector<4x512xf32>
    %101 = arith.mulf %98, %100 : vector<4x512xf32>
    %c0_50 = arith.constant 0 : index
    %c0_51 = arith.constant 0 : index
    %102 = vector.load %arg7[%c0_50, %c0_51] : memref<40x512xf32, #tpu.memory_space<vmem>>, vector<4x512xf32>
    tpu.vector_store %arg7[%c0_50, %c0_51], %101 {strides = array<i32>} : memref<40x512xf32, #tpu.memory_space<vmem>>, vector<4x512xf32>,
    %103 = vector.extract_strided_slice %95 {offsets = [0, 496], sizes = [4, 16], strides = [1, 1]} : vector<4x512xf32> to vector<4x16xf32>
    %104 = vector.extract_strided_slice %95 {offsets = [0, 0], sizes = [4, 496], strides = [1, 1]} : vector<4x512xf32> to vector<4x496xf32>
    %105 = tpu.concatenate %103, %104 in 1 : vector<4x16xf32>, vector<4x496xf32> -> vector<4x512xf32>
    %c1_52 = arith.constant 1 : index
    %c0_53 = arith.constant 0 : index
    %106 = vector.load %arg2[%c1_52, %c0_53] : memref<9x512xf32, #tpu.memory_space<vmem>>, vector<1x512xf32>
    %107 = vector.broadcast %106 : vector<1x512xf32> to vector<4x512xf32>
    %108 = arith.mulf %105, %107 : vector<4x512xf32>
    %c4_54 = arith.constant 4 : index
    %c0_55 = arith.constant 0 : index
    %109 = vector.load %arg7[%c4_54, %c0_55] : memref<40x512xf32, #tpu.memory_space<vmem>>, vector<4x512xf32>
    tpu.vector_store %arg7[%c4_54, %c0_55], %108 {strides = array<i32>} : memref<40x512xf32, #tpu.memory_space<vmem>>, vector<4x512xf32>,
    %110 = vector.extract_strided_slice %95 {offsets = [0, 497], sizes = [4, 15], strides = [1, 1]} : vector<4x512xf32> to vector<4x15xf32>
    %111 = vector.extract_strided_slice %95 {offsets = [0, 0], sizes = [4, 497], strides = [1, 1]} : vector<4x512xf32> to vector<4x497xf32>
    %112 = tpu.concatenate %110, %111 in 1 : vector<4x15xf32>, vector<4x497xf32> -> vector<4x512xf32>
    %c2_56 = arith.constant 2 : index
    %c0_57 = arith.constant 0 : index
    %113 = vector.load %arg2[%c2_56, %c0_57] : memref<9x512xf32, #tpu.memory_space<vmem>>, vector<1x512xf32>
    %114 = vector.broadcast %113 : vector<1x512xf32> to vector<4x512xf32>
    %115 = arith.mulf %112, %114 : vector<4x512xf32>
    %c8_58 = arith.constant 8 : index
    %c0_59 = arith.constant 0 : index
    %116 = vector.load %arg7[%c8_58, %c0_59] : memref<40x512xf32, #tpu.memory_space<vmem>>, vector<4x512xf32>
    tpu.vector_store %arg7[%c8_58, %c0_59], %115 {strides = array<i32>} : memref<40x512xf32, #tpu.memory_space<vmem>>, vector<4x512xf32>,
    %117 = vector.extract_strided_slice %95 {offsets = [0, 511], sizes = [4, 1], strides = [1, 1]} : vector<4x512xf32> to vector<4x1xf32>
    %118 = vector.extract_strided_slice %95 {offsets = [0, 0], sizes = [4, 511], strides = [1, 1]} : vector<4x512xf32> to vector<4x511xf32>
    %119 = tpu.concatenate %117, %118 in 1 : vector<4x1xf32>, vector<4x511xf32> -> vector<4x512xf32>
    %c3_60 = arith.constant 3 : index
    %c0_61 = arith.constant 0 : index
    %120 = vector.load %arg2[%c3_60, %c0_61] : memref<9x512xf32, #tpu.memory_space<vmem>>, vector<1x512xf32>
    %121 = vector.broadcast %120 : vector<1x512xf32> to vector<4x512xf32>
    %122 = arith.mulf %119, %121 : vector<4x512xf32>
    %c12_62 = arith.constant 12 : index
    %c0_63 = arith.constant 0 : index
    %123 = vector.load %arg7[%c12_62, %c0_63] : memref<40x512xf32, #tpu.memory_space<vmem>>, vector<4x512xf32>
    tpu.vector_store %arg7[%c12_62, %c0_63], %122 {strides = array<i32>} : memref<40x512xf32, #tpu.memory_space<vmem>>, vector<4x512xf32>,
    %c4_64 = arith.constant 4 : index
    %c0_65 = arith.constant 0 : index
    %124 = vector.load %arg2[%c4_64, %c0_65] : memref<9x512xf32, #tpu.memory_space<vmem>>, vector<1x512xf32>
    %125 = vector.broadcast %124 : vector<1x512xf32> to vector<4x512xf32>
    %126 = arith.mulf %95, %125 : vector<4x512xf32>
    %c16_66 = arith.constant 16 : index
    %c0_67 = arith.constant 0 : index
    %127 = vector.load %arg7[%c16_66, %c0_67] : memref<40x512xf32, #tpu.memory_space<vmem>>, vector<4x512xf32>
    tpu.vector_store %arg7[%c16_66, %c0_67], %126 {strides = array<i32>} : memref<40x512xf32, #tpu.memory_space<vmem>>, vector<4x512xf32>,
    %128 = vector.extract_strided_slice %95 {offsets = [0, 1], sizes = [4, 511], strides = [1, 1]} : vector<4x512xf32> to vector<4x511xf32>
    %129 = vector.extract_strided_slice %95 {offsets = [0, 0], sizes = [4, 1], strides = [1, 1]} : vector<4x512xf32> to vector<4x1xf32>
    %130 = tpu.concatenate %128, %129 in 1 : vector<4x511xf32>, vector<4x1xf32> -> vector<4x512xf32>
    %c5_68 = arith.constant 5 : index
    %c0_69 = arith.constant 0 : index
    %131 = vector.load %arg2[%c5_68, %c0_69] : memref<9x512xf32, #tpu.memory_space<vmem>>, vector<1x512xf32>
    %132 = vector.broadcast %131 : vector<1x512xf32> to vector<4x512xf32>
    %133 = arith.mulf %130, %132 : vector<4x512xf32>
    %c20_70 = arith.constant 20 : index
    %c0_71 = arith.constant 0 : index
    %134 = vector.load %arg7[%c20_70, %c0_71] : memref<40x512xf32, #tpu.memory_space<vmem>>, vector<4x512xf32>
    tpu.vector_store %arg7[%c20_70, %c0_71], %133 {strides = array<i32>} : memref<40x512xf32, #tpu.memory_space<vmem>>, vector<4x512xf32>,
    %135 = vector.extract_strided_slice %95 {offsets = [0, 15], sizes = [4, 497], strides = [1, 1]} : vector<4x512xf32> to vector<4x497xf32>
    %136 = vector.extract_strided_slice %95 {offsets = [0, 0], sizes = [4, 15], strides = [1, 1]} : vector<4x512xf32> to vector<4x15xf32>
    %137 = tpu.concatenate %135, %136 in 1 : vector<4x497xf32>, vector<4x15xf32> -> vector<4x512xf32>
    %c6_72 = arith.constant 6 : index
    %c0_73 = arith.constant 0 : index
    %138 = vector.load %arg2[%c6_72, %c0_73] : memref<9x512xf32, #tpu.memory_space<vmem>>, vector<1x512xf32>
    %139 = vector.broadcast %138 : vector<1x512xf32> to vector<4x512xf32>
    %140 = arith.mulf %137, %139 : vector<4x512xf32>
    %c24_74 = arith.constant 24 : index
    %c0_75 = arith.constant 0 : index
    %141 = vector.load %arg7[%c24_74, %c0_75] : memref<40x512xf32, #tpu.memory_space<vmem>>, vector<4x512xf32>
    tpu.vector_store %arg7[%c24_74, %c0_75], %140 {strides = array<i32>} : memref<40x512xf32, #tpu.memory_space<vmem>>, vector<4x512xf32>,
    %142 = vector.extract_strided_slice %95 {offsets = [0, 16], sizes = [4, 496], strides = [1, 1]} : vector<4x512xf32> to vector<4x496xf32>
    %143 = vector.extract_strided_slice %95 {offsets = [0, 0], sizes = [4, 16], strides = [1, 1]} : vector<4x512xf32> to vector<4x16xf32>
    %144 = tpu.concatenate %142, %143 in 1 : vector<4x496xf32>, vector<4x16xf32> -> vector<4x512xf32>
    %c7_76 = arith.constant 7 : index
    %c0_77 = arith.constant 0 : index
    %145 = vector.load %arg2[%c7_76, %c0_77] : memref<9x512xf32, #tpu.memory_space<vmem>>, vector<1x512xf32>
    %146 = vector.broadcast %145 : vector<1x512xf32> to vector<4x512xf32>
    %147 = arith.mulf %144, %146 : vector<4x512xf32>
    %c28_78 = arith.constant 28 : index
    %c0_79 = arith.constant 0 : index
    %148 = vector.load %arg7[%c28_78, %c0_79] : memref<40x512xf32, #tpu.memory_space<vmem>>, vector<4x512xf32>
    tpu.vector_store %arg7[%c28_78, %c0_79], %147 {strides = array<i32>} : memref<40x512xf32, #tpu.memory_space<vmem>>, vector<4x512xf32>,
    %149 = vector.extract_strided_slice %95 {offsets = [0, 17], sizes = [4, 495], strides = [1, 1]} : vector<4x512xf32> to vector<4x495xf32>
    %150 = vector.extract_strided_slice %95 {offsets = [0, 0], sizes = [4, 17], strides = [1, 1]} : vector<4x512xf32> to vector<4x17xf32>
    %151 = tpu.concatenate %149, %150 in 1 : vector<4x495xf32>, vector<4x17xf32> -> vector<4x512xf32>
    %c8_80 = arith.constant 8 : index
    %c0_81 = arith.constant 0 : index
    %152 = vector.load %arg2[%c8_80, %c0_81] : memref<9x512xf32, #tpu.memory_space<vmem>>, vector<1x512xf32>
    %153 = vector.broadcast %152 : vector<1x512xf32> to vector<4x512xf32>
    %154 = arith.mulf %151, %153 : vector<4x512xf32>
    %c32_82 = arith.constant 32 : index
    %c0_83 = arith.constant 0 : index
    %155 = vector.load %arg7[%c32_82, %c0_83] : memref<40x512xf32, #tpu.memory_space<vmem>>, vector<4x512xf32>
    tpu.vector_store %arg7[%c32_82, %c0_83], %154 {strides = array<i32>} : memref<40x512xf32, #tpu.memory_space<vmem>>, vector<4x512xf32>,
    %c0_84 = arith.constant 0 : index
    %c0_85 = arith.constant 0 : index
    %156 = vector.load %arg4[%c0_84, %c0_85] : memref<8x40xf32, #tpu.memory_space<vmem>>, vector<8x40xf32>
    %c0_86 = arith.constant 0 : index
    %c0_87 = arith.constant 0 : index
    %157 = vector.load %arg7[%c0_86, %c0_87] : memref<40x512xf32, #tpu.memory_space<vmem>>, vector<40x512xf32>
    %cst_88 = arith.constant dense<0.000000e+00> : vector<8x512xf32>
    %158 = tpu.matmul %156, %157, %cst_88 {dimension_numbers = #tpu.dot_dimension_numbers<[1], [0], [0], [1], [0, 0, 1, 1], [], []>} : vector<8x40xf32>, vector<40x512xf32>, vector<8x512xf32> -> vector<8x512xf32>
    %159 = vector.extract_strided_slice %158 {offsets = [0, 0], sizes = [4, 512], strides = [1, 1]} : vector<8x512xf32> to vector<4x512xf32>
    %cst_89 = arith.constant dense<0.000000e+00> : vector<4xf32>
    %160 = vector.multi_reduction <add>, %159, %cst_89 [1] : vector<4x512xf32> to vector<4xf32>
    %161 = vector.shape_cast %160 : vector<4xf32> to vector<4x1xf32>
    %cst_90 = arith.constant 0.001953125 : f32
    %162 = vector.broadcast %cst_90 : f32 to vector<4x1xf32>
    %163 = arith.mulf %161, %162 : vector<4x1xf32>
    %164 = vector.broadcast %163 : vector<4x1xf32> to vector<4x512xf32>
    %165 = arith.subf %159, %164 : vector<4x512xf32>
    %166 = arith.mulf %165, %165 : vector<4x512xf32>
    %cst_91 = arith.constant dense<0.000000e+00> : vector<4xf32>
    %167 = vector.multi_reduction <add>, %166, %cst_91 [1] : vector<4x512xf32> to vector<4xf32>
    %168 = vector.shape_cast %167 : vector<4xf32> to vector<4x1xf32>
    %cst_92 = arith.constant 0.001953125 : f32
    %169 = vector.broadcast %cst_92 : f32 to vector<4x1xf32>
    %170 = arith.mulf %168, %169 : vector<4x1xf32>
    %cst_93 = arith.constant 9.99999974E-6 : f32
    %171 = vector.broadcast %cst_93 : f32 to vector<4x1xf32>
    %172 = arith.addf %170, %171 : vector<4x1xf32>
    %173 = math.rsqrt %172 : vector<4x1xf32>
    %174 = arith.mulf %9, %173 : vector<4x1xf32>
    %175 = vector.broadcast %174 : vector<4x1xf32> to vector<4x512xf32>
    %176 = arith.mulf %165, %175 : vector<4x512xf32>
    %177 = vector.broadcast %10 : vector<4x1xf32> to vector<4x512xf32>
    %178 = arith.addf %176, %177 : vector<4x512xf32>
    %179 = arith.addf %178, %4 : vector<4x512xf32>
    %cst_94 = arith.constant 0.000000e+00 : f32
    %180 = vector.broadcast %cst_94 : f32 to vector<4x512xf32>
    %181 = arith.maximumf %179, %180 : vector<4x512xf32>
    %182 = vector.extract_strided_slice %181 {offsets = [0, 0], sizes = [4, 256], strides = [1, 1]} : vector<4x512xf32> to vector<4x256xf32>
    %c0_95 = arith.constant 0 : index
    %c0_96 = arith.constant 0 : index
    %c0_97 = arith.constant 0 : index
    %183 = vector.load %arg6[%c0_95, %c0_96, %c0_97] : memref<2x4x256xf32, #tpu.memory_space<vmem>>, vector<1x4x256xf32>
    %184 = vector.shape_cast %183 : vector<1x4x256xf32> to vector<4x256xf32>
    %185 = vector.shape_cast %182 : vector<4x256xf32> to vector<1x4x256xf32>
    tpu.vector_store %arg6[%c0_95, %c0_96, %c0_97], %185 {strides = array<i32>} : memref<2x4x256xf32, #tpu.memory_space<vmem>>, vector<1x4x256xf32>,
    %186 = vector.extract_strided_slice %181 {offsets = [0, 256], sizes = [4, 256], strides = [1, 1]} : vector<4x512xf32> to vector<4x256xf32>
    %c1_98 = arith.constant 1 : index
    %c0_99 = arith.constant 0 : index
    %c0_100 = arith.constant 0 : index
    %187 = vector.load %arg6[%c1_98, %c0_99, %c0_100] : memref<2x4x256xf32, #tpu.memory_space<vmem>>, vector<1x4x256xf32>
    %188 = vector.shape_cast %187 : vector<1x4x256xf32> to vector<4x256xf32>
    %189 = vector.shape_cast %186 : vector<4x256xf32> to vector<1x4x256xf32>
    tpu.vector_store %arg6[%c1_98, %c0_99, %c0_100], %189 {strides = array<i32>} : memref<2x4x256xf32, #tpu.memory_space<vmem>>, vector<1x4x256xf32>,
    return
  }
  func.func @transform_0(%arg0: i32) -> (i32, i32, i32) {
    %c0_i32 = arith.constant 0 : i32
    %c0_i32_0 = arith.constant 0 : i32
    %c0_i32_1 = arith.constant 0 : i32
    %c0_i32_2 = arith.constant 0 : i32
    return %c0_i32, %c0_i32_0, %c0_i32_1 : i32, i32, i32
  }
  func.func @transform_1(%arg0: i32) -> (i32, i32) {
    %c0_i32 = arith.constant 0 : i32
    %c0_i32_0 = arith.constant 0 : i32
    %c0_i32_1 = arith.constant 0 : i32
    return %c0_i32, %c0_i32_0 : i32, i32
  }
  func.func @transform_2(%arg0: i32) -> (i32, i32) {
    %c0_i32 = arith.constant 0 : i32
    %c0_i32_0 = arith.constant 0 : i32
    %c0_i32_1 = arith.constant 0 : i32
    return %c0_i32, %c0_i32_0 : i32, i32
  }
  func.func @transform_3(%arg0: i32) -> (i32, i32) {
    %c0_i32 = arith.constant 0 : i32
    %c0_i32_0 = arith.constant 0 : i32
    %c0_i32_1 = arith.constant 0 : i32
    return %c0_i32, %c0_i32_0 : i32, i32
  }
  func.func @transform_4(%arg0: i32) -> (i32, i32) {
    %c0_i32 = arith.constant 0 : i32
    %c0_i32_0 = arith.constant 0 : i32
    %c0_i32_1 = arith.constant 0 : i32
    return %c0_i32, %c0_i32_0 : i32, i32
  }
  func.func @transform_5(%arg0: i32) -> (i32, i32, i32) {
    %c0_i32 = arith.constant 0 : i32
    %c0_i32_0 = arith.constant 0 : i32
    %c0_i32_1 = arith.constant 0 : i32
    %c0_i32_2 = arith.constant 0 : i32
    return %c0_i32, %c0_i32_0, %c0_i32_1 : i32, i32, i32
  }
}

</mosaic_0001>

<llo_original>
// kernel: basic_block_forward.1
$region0: #{basic_block_forward.1}
  #allocation0 [shape = 'u32[]', space=smem, size = 0x4, offset = 0x4, fixed_abs, tag = 'smem constant byte address 0x4 - core index']
  #allocation1 [shape = 'u32[72,128]{1,0:T(1,128)}', space=vmem, size = 0x9000, scoped, tag = 'internal scratch']
  #allocation2 [shape = 'f32[40,512]{1,0:T(8,128)}', space=vmem, size = 0x14000, scoped, tag = 'scratch operand']
  %s0 = inlined_call_operand.vmem [shape: f32[2,4,256], index: 0, kind: input, shape index: {}]
  %s1 = inlined_call_operand.vmem [shape: f32[9,512], index: 1, kind: input, shape index: {}]
  %s2 = inlined_call_operand.vmem [shape: f32[8,40], index: 2, kind: input, shape index: {}]
  %s3 = inlined_call_operand.vmem [shape: f32[8,40], index: 3, kind: input, shape index: {}]
  %s4 = inlined_call_operand.vmem [shape: f32[4,4], index: 4, kind: input, shape index: {}]
  %s5 = inlined_call_operand.vmem [shape: f32[2,4,256], index: 5, kind: output, shape index: {}]
  %s6 = sld [smem:[#allocation0]]
  $region30: #{basic_block_forward.1} parent=0
    _
  %s8 = ssub.s32 1, %s6
  %s9 = scalar_select 0, %s8, %s6
  // Predicated region
  $region2: #{basic_block_forward.1} parent=0 // pred_check
    _
  $region3: #{basic_block_forward.1} parent=0 // pred_check_branch
    %11 = sbr.rel (0) target = $region5
  $region4: #{basic_block_forward.1} parent=0 // pred_region
    _
  $region5: #{basic_block_forward.1} parent=0 // pred_fallthru
    _
  // Predicated region
  $region6: #{basic_block_forward.1} parent=0 // pred_check
    _
  $region7: #{basic_block_forward.1} parent=0 // pred_check_branch
    %13 = sbr.rel (0) target = $region9
  $region8: #{basic_block_forward.1} parent=0 // pred_region
    _
  $region9: #{basic_block_forward.1} parent=0 // pred_fallthru
    _
  // Predicated region
  $region10: #{basic_block_forward.1} parent=0 // pred_check
    _
  $region11: #{basic_block_forward.1} parent=0 // pred_check_branch
    %15 = sbr.rel (0) target = $region13
  $region12: #{basic_block_forward.1} parent=0 // pred_region
    _
  $region13: #{basic_block_forward.1} parent=0 // pred_fallthru
    _
  // Predicated region
  $region14: #{basic_block_forward.1} parent=0 // pred_check
    _
  $region15: #{basic_block_forward.1} parent=0 // pred_check_branch
    %17 = sbr.rel (0) target = $region17
  $region16: #{basic_block_forward.1} parent=0 // pred_region
    _
  $region17: #{basic_block_forward.1} parent=0 // pred_fallthru
    _
  // Predicated region
  $region18: #{basic_block_forward.1} parent=0 // pred_check
    _
  $region19: #{basic_block_forward.1} parent=0 // pred_check_branch
    %19 = sbr.rel (0) target = $region21
  $region20: #{basic_block_forward.1} parent=0 // pred_region
    _
  $region21: #{basic_block_forward.1} parent=0 // pred_fallthru
    _
  %v20 = vld [vmem:[%s0] sm:$0xff]
  %s21 = scalar_lea.vmem %s0, 8
  %v22 = vld [vmem:[%s21] sm:$0xff]
  %24 = vst [vmem:[#allocation1] ss:$2 sm:$0xff] %v20
  %v25 = vld.sshfl [vmem:[#allocation1] sm:$0xff pattern:$0x75316420]
  %v26 = vld.sshfl [vmem:[#allocation1 + $0x8] sm:$0xff pattern:$0x75316420]
  %30 = vst [vmem:[#allocation1] ss:$2 sm:$0xff] %v22
  %v31 = vld.sshfl [vmem:[#allocation1] sm:$0xff pattern:$0x75316420]
  %v32 = vld.sshfl [vmem:[#allocation1 + $0x8] sm:$0xff pattern:$0x75316420]
  %35 = vst [vmem:[#allocation2] sm:$0xff] 0.0
  %36 = vst [vmem:[#allocation2 + $0x8] sm:$0xff] 0.0
  %37 = vst [vmem:[#allocation2 + $0x10] sm:$0xff] 0.0
  %38 = vst [vmem:[#allocation2 + $0x18] sm:$0xff] 0.0
  %39 = vst [vmem:[#allocation2 + $0x20] sm:$0xff] 0.0
  %40 = vst [vmem:[#allocation2 + $0x28] sm:$0xff] 0.0
  %41 = vst [vmem:[#allocation2 + $0x30] sm:$0xff] 0.0
  %42 = vst [vmem:[#allocation2 + $0x38] sm:$0xff] 0.0
  %43 = vst [vmem:[#allocation2 + $0x40] sm:$0xff] 0.0
  %44 = vst [vmem:[#allocation2 + $0x48] sm:$0xff] 0.0
  %45 = vst [vmem:[#allocation2 + $0x50] sm:$0xff] 0.0
  %46 = vst [vmem:[#allocation2 + $0x58] sm:$0xff] 0.0
  %47 = vst [vmem:[#allocation2 + $0x60] sm:$0xff] 0.0
  %48 = vst [vmem:[#allocation2 + $0x68] sm:$0xff] 0.0
  %49 = vst [vmem:[#allocation2 + $0x70] sm:$0xff] 0.0
  %50 = vst [vmem:[#allocation2 + $0x78] sm:$0xff] 0.0
  %51 = vst [vmem:[#allocation2 + $0x80] sm:$0xff] 0.0
  %52 = vst [vmem:[#allocation2 + $0x88] sm:$0xff] 0.0
  %53 = vst [vmem:[#allocation2 + $0x90] sm:$0xff] 0.0
  %54 = vst [vmem:[#allocation2 + $0x98] sm:$0xff] 0.0
  %v55 = vld [vmem:[%s4] sm:$0xf]
  %56 = vrot.lane.b32.xlu0 %v32, 17
  %v57 = vpop.permute.xlu0 %56
  %59 = vrot.lane.b32.xlu0 %v25, 17
  %v60 = vpop.permute.xlu0 %59
  %61 = vrot.lane.b32.xlu0 %v26, 17
  %v62 = vpop.permute.xlu0 %61
  %63 = vrot.lane.b32.xlu0 %v31, 17
  %v64 = vpop.permute.xlu0 %63
  %vm65 = vcmask 138240
  %v66 = vsel %vm65, %v60, %v62
  %v67 = vsel %vm65, %v62, %v64
  %v68 = vsel %vm65, %v64, %v57
  %v73 = vsel %vm65, %v57, %v60
  %v74 = vld [vmem:[%s1] ss:$8 sm:$0xf]
  %v76 = vperm.slane %v74, 0
  %v77 = vperm.slane %v74, 1
  %v78 = vperm.slane %v74, 2
  %v79 = vperm.slane %v74, 3
  %v84 = vmul.f32 %v73, %v76
  %v85 = vmul.f32 %v66, %v77
  %v86 = vmul.f32 %v67, %v78
  %v87 = vmul.f32 %v68, %v79
  %88 = vst [vmem:[#allocation2] sm:$0xf] %v84
  %89 = vst [vmem:[#allocation2 + $0x8] sm:$0xf] %v85
  %90 = vst [vmem:[#allocation2 + $0x10] sm:$0xf] %v86
  %91 = vst [vmem:[#allocation2 + $0x18] sm:$0xf] %v87
  %92 = vrot.lane.b32.xlu0 %v32, 16
  %v93 = vpop.permute.xlu0 %92
  %95 = vrot.lane.b32.xlu0 %v25, 16
  %v96 = vpop.permute.xlu0 %95
  %97 = vrot.lane.b32.xlu0 %v26, 16
  %v98 = vpop.permute.xlu0 %97
  %99 = vrot.lane.b32.xlu0 %v31, 16
  %v100 = vpop.permute.xlu0 %99
  %vm101 = vcmask 130048
  %v102 = vsel %vm101, %v96, %v98
  %v103 = vsel %vm101, %v98, %v100
  %v104 = vsel %vm101, %v100, %v93
  %v109 = vsel %vm101, %v93, %v96
  %s110 = scalar_lea.vmem %s1, 1
  %v111 = vld [vmem:[%s110] ss:$8 sm:$0xf]
  %v113 = vperm.slane %v111, 0
  %v114 = vperm.slane %v111, 1
  %v115 = vperm.slane %v111, 2
  %v116 = vperm.slane %v111, 3
  %v121 = vmul.f32 %v109, %v113
  %v122 = vmul.f32 %v102, %v114
  %v123 = vmul.f32 %v103, %v115
  %v124 = vmul.f32 %v104, %v116
  %v129 = vrot.slane %v121, 4
  %v130 = vrot.slane %v122, 4
  %v131 = vrot.slane %v123, 4
  %v132 = vrot.slane %v124, 4
  %137 = vst [vmem:[#allocation2] sm:$0xf0] %v129
  %138 = vst [vmem:[#allocation2 + $0x8] sm:$0xf0] %v130
  %139 = vst [vmem:[#allocation2 + $0x10] sm:$0xf0] %v131
  %140 = vst [vmem:[#allocation2 + $0x18] sm:$0xf0] %v132
  %141 = vrot.lane.b32.xlu0 %v32, 15
  %v142 = vpop.permute.xlu0 %141
  %144 = vrot.lane.b32.xlu0 %v25, 15
  %v145 = vpop.permute.xlu0 %144
  %146 = vrot.lane.b32.xlu0 %v26, 15
  %v147 = vpop.permute.xlu0 %146
  %148 = vrot.lane.b32.xlu0 %v31, 15
  %v149 = vpop.permute.xlu0 %148
  %vm150 = vcmask 121856
  %v151 = vsel %vm150, %v145, %v147
  %v152 = vsel %vm150, %v147, %v149
  %v153 = vsel %vm150, %v149, %v142
  %v158 = vsel %vm150, %v142, %v145
  %s159 = scalar_lea.vmem %s1, 2
  %v160 = vld [vmem:[%s159] ss:$8 sm:$0xf]
  %v162 = vperm.slane %v160, 0
  %v163 = vperm.slane %v160, 1
  %v164 = vperm.slane %v160, 2
  %v165 = vperm.slane %v160, 3
  %v170 = vmul.f32 %v158, %v162
  %v171 = vmul.f32 %v151, %v163
  %v172 = vmul.f32 %v152, %v164
  %v173 = vmul.f32 %v153, %v165
  %174 = vst [vmem:[#allocation2 + $0x20] sm:$0xf] %v170
  %175 = vst [vmem:[#allocation2 + $0x28] sm:$0xf] %v171
  %176 = vst [vmem:[#allocation2 + $0x30] sm:$0xf] %v172
  %177 = vst [vmem:[#allocation2 + $0x38] sm:$0xf] %v173
  %178 = vrot.lane.b32.xlu0 %v32, 1
  %v179 = vpop.permute.xlu0 %178
  %181 = vrot.lane.b32.xlu0 %v25, 1
  %v182 = vpop.permute.xlu0 %181
  %183 = vrot.lane.b32.xlu0 %v26, 1
  %v184 = vpop.permute.xlu0 %183
  %185 = vrot.lane.b32.xlu0 %v31, 1
  %v186 = vpop.permute.xlu0 %185
  %vm187 = vcmask 7168
  %v188 = vsel %vm187, %v182, %v184
  %v189 = vsel %vm187, %v184, %v186
  %v190 = vsel %vm187, %v186, %v179
  %v195 = vsel %vm187, %v179, %v182
  %s196 = scalar_lea.vmem %s1, 3
  %v197 = vld [vmem:[%s196] ss:$8 sm:$0xf]
  %v199 = vperm.slane %v197, 0
  %v200 = vperm.slane %v197, 1
  %v201 = vperm.slane %v197, 2
  %v202 = vperm.slane %v197, 3
  %v207 = vmul.f32 %v195, %v199
  %v208 = vmul.f32 %v188, %v200
  %v209 = vmul.f32 %v189, %v201
  %v210 = vmul.f32 %v190, %v202
  %v215 = vrot.slane %v207, 4
  %v216 = vrot.slane %v208, 4
  %v217 = vrot.slane %v209, 4
  %v218 = vrot.slane %v210, 4
  %223 = vst [vmem:[#allocation2 + $0x20] sm:$0xf0] %v215
  %224 = vst [vmem:[#allocation2 + $0x28] sm:$0xf0] %v216
  %225 = vst [vmem:[#allocation2 + $0x30] sm:$0xf0] %v217
  %226 = vst [vmem:[#allocation2 + $0x38] sm:$0xf0] %v218
  %s227 = scalar_lea.vmem %s1, 4
  %v228 = vld [vmem:[%s227] ss:$8 sm:$0xf]
  %v230 = vperm.slane %v228, 0
  %v231 = vperm.slane %v228, 1
  %v232 = vperm.slane %v228, 2
  %v233 = vperm.slane %v228, 3
  %v238 = vmul.f32 %v25, %v230
  %v239 = vmul.f32 %v26, %v231
  %v240 = vmul.f32 %v31, %v232
  %v241 = vmul.f32 %v32, %v233
  %242 = vst [vmem:[#allocation2 + $0x40] sm:$0xf] %v238
  %243 = vst [vmem:[#allocation2 + $0x48] sm:$0xf] %v239
  %244 = vst [vmem:[#allocation2 + $0x50] sm:$0xf] %v240
  %245 = vst [vmem:[#allocation2 + $0x58] sm:$0xf] %v241
  %246 = vrot.lane.b32.xlu0 %v25, 127
  %v247 = vpop.permute.xlu0 %246
  %248 = vrot.lane.b32.xlu0 %v26, 127
  %v249 = vpop.permute.xlu0 %248
  %250 = vrot.lane.b32.xlu0 %v31, 127
  %v251 = vpop.permute.xlu0 %250
  %252 = vrot.lane.b32.xlu0 %v32, 127
  %v253 = vpop.permute.xlu0 %252
  %vm254 = vcmask 1039360
  %v255 = vsel %vm254, %v247, %v249
  %v256 = vsel %vm254, %v249, %v251
  %v257 = vsel %vm254, %v251, %v253
  %v263 = vsel %vm254, %v253, %v247
  %s264 = scalar_lea.vmem %s1, 5
  %v265 = vld [vmem:[%s264] ss:$8 sm:$0xf]
  %v267 = vperm.slane %v265, 0
  %v268 = vperm.slane %v265, 1
  %v269 = vperm.slane %v265, 2
  %v270 = vperm.slane %v265, 3
  %v275 = vmul.f32 %v255, %v267
  %v276 = vmul.f32 %v256, %v268
  %v277 = vmul.f32 %v257, %v269
  %v278 = vmul.f32 %v263, %v270
  %v283 = vrot.slane %v275, 4
  %v284 = vrot.slane %v276, 4
  %v285 = vrot.slane %v277, 4
  %v286 = vrot.slane %v278, 4
  %291 = vst [vmem:[#allocation2 + $0x40] sm:$0xf0] %v283
  %292 = vst [vmem:[#allocation2 + $0x48] sm:$0xf0] %v284
  %293 = vst [vmem:[#allocation2 + $0x50] sm:$0xf0] %v285
  %294 = vst [vmem:[#allocation2 + $0x58] sm:$0xf0] %v286
  %295 = vrot.lane.b32.xlu0 %v25, 113
  %v296 = vpop.permute.xlu0 %295
  %297 = vrot.lane.b32.xlu0 %v26, 113
  %v298 = vpop.permute.xlu0 %297
  %299 = vrot.lane.b32.xlu0 %v31, 113
  %v300 = vpop.permute.xlu0 %299
  %301 = vrot.lane.b32.xlu0 %v32, 113
  %v302 = vpop.permute.xlu0 %301
  %vm303 = vcmask 924672
  %v304 = vsel %vm303, %v296, %v298
  %v305 = vsel %vm303, %v298, %v300
  %v306 = vsel %vm303, %v300, %v302
  %v312 = vsel %vm303, %v302, %v296
  %s313 = scalar_lea.vmem %s1, 6
  %v314 = vld [vmem:[%s313] ss:$8 sm:$0xf]
  %v316 = vperm.slane %v314, 0
  %v317 = vperm.slane %v314, 1
  %v318 = vperm.slane %v314, 2
  %v319 = vperm.slane %v314, 3
  %v324 = vmul.f32 %v304, %v316
  %v325 = vmul.f32 %v305, %v317
  %v326 = vmul.f32 %v306, %v318
  %v327 = vmul.f32 %v312, %v319
  %328 = vst [vmem:[#allocation2 + $0x60] sm:$0xf] %v324
  %329 = vst [vmem:[#allocation2 + $0x68] sm:$0xf] %v325
  %330 = vst [vmem:[#allocation2 + $0x70] sm:$0xf] %v326
  %331 = vst [vmem:[#allocation2 + $0x78] sm:$0xf] %v327
  %332 = vrot.lane.b32.xlu0 %v25, 112
  %v333 = vpop.permute.xlu0 %332
  %334 = vrot.lane.b32.xlu0 %v26, 112
  %v335 = vpop.permute.xlu0 %334
  %336 = vrot.lane.b32.xlu0 %v31, 112
  %v337 = vpop.permute.xlu0 %336
  %338 = vrot.lane.b32.xlu0 %v32, 112
  %v339 = vpop.permute.xlu0 %338
  %vm340 = vcmask 916480
  %v341 = vsel %vm340, %v333, %v335
  %v342 = vsel %vm340, %v335, %v337
  %v343 = vsel %vm340, %v337, %v339
  %v349 = vsel %vm340, %v339, %v333
  %s350 = scalar_lea.vmem %s1, 7
  %v351 = vld [vmem:[%s350] ss:$8 sm:$0xf]
  %v353 = vperm.slane %v351, 0
  %v354 = vperm.slane %v351, 1
  %v355 = vperm.slane %v351, 2
  %v356 = vperm.slane %v351, 3
  %v361 = vmul.f32 %v341, %v353
  %v362 = vmul.f32 %v342, %v354
  %v363 = vmul.f32 %v343, %v355
  %v364 = vmul.f32 %v349, %v356
  %v369 = vrot.slane %v361, 4
  %v370 = vrot.slane %v362, 4
  %v371 = vrot.slane %v363, 4
  %v372 = vrot.slane %v364, 4
  %377 = vst [vmem:[#allocation2 + $0x60] sm:$0xf0] %v369
  %378 = vst [vmem:[#allocation2 + $0x68] sm:$0xf0] %v370
  %379 = vst [vmem:[#allocation2 + $0x70] sm:$0xf0] %v371
  %380 = vst [vmem:[#allocation2 + $0x78] sm:$0xf0] %v372
  %381 = vrot.lane.b32.xlu0 %v25, 111
  %v382 = vpop.permute.xlu0 %381
  %383 = vrot.lane.b32.xlu0 %v26, 111
  %v384 = vpop.permute.xlu0 %383
  %385 = vrot.lane.b32.xlu0 %v31, 111
  %v386 = vpop.permute.xlu0 %385
  %387 = vrot.lane.b32.xlu0 %v32, 111
  %v388 = vpop.permute.xlu0 %387
  %vm389 = vcmask 908288
  %v390 = vsel %vm389, %v382, %v384
  %v391 = vsel %vm389, %v384, %v386
  %v392 = vsel %vm389, %v386, %v388
  %v398 = vsel %vm389, %v388, %v382
  %s399 = scalar_lea.vmem %s1, 32
  %v400 = vld [vmem:[%s399] ss:$8 sm:$0xf]
  %v402 = vperm.slane %v400, 0
  %v403 = vperm.slane %v400, 1
  %v404 = vperm.slane %v400, 2
  %v405 = vperm.slane %v400, 3
  %v410 = vmul.f32 %v390, %v402
  %v411 = vmul.f32 %v391, %v403
  %v412 = vmul.f32 %v392, %v404
  %v413 = vmul.f32 %v398, %v405
  %414 = vst [vmem:[#allocation2 + $0x80] sm:$0xf] %v410
  %415 = vst [vmem:[#allocation2 + $0x88] sm:$0xf] %v411
  %416 = vst [vmem:[#allocation2 + $0x90] sm:$0xf] %v412
  %417 = vst [vmem:[#allocation2 + $0x98] sm:$0xf] %v413
  %v418 = vld [vmem:[%s2] sm:$0xff]
  %v419 = vld [vmem:[#allocation2] sm:$0xff]
  %v420 = vld [vmem:[#allocation2 + $0x8] sm:$0xff]
  %v421 = vld [vmem:[#allocation2 + $0x10] sm:$0xff]
  %v422 = vld [vmem:[#allocation2 + $0x18] sm:$0xff]
  %v423 = vld [vmem:[#allocation2 + $0x20] sm:$0xff]
  %v424 = vld [vmem:[#allocation2 + $0x28] sm:$0xff]
  %v425 = vld [vmem:[#allocation2 + $0x30] sm:$0xff]
  %v426 = vld [vmem:[#allocation2 + $0x38] sm:$0xff]
  %v427 = vld [vmem:[#allocation2 + $0x40] sm:$0xff]
  %v428 = vld [vmem:[#allocation2 + $0x48] sm:$0xff]
  %v429 = vld [vmem:[#allocation2 + $0x50] sm:$0xff]
  %v430 = vld [vmem:[#allocation2 + $0x58] sm:$0xff]
  %v431 = vld [vmem:[#allocation2 + $0x60] sm:$0xff]
  %v432 = vld [vmem:[#allocation2 + $0x68] sm:$0xff]
  %v433 = vld [vmem:[#allocation2 + $0x70] sm:$0xff]
  %v434 = vld [vmem:[#allocation2 + $0x78] sm:$0xff]
  %v435 = vld [vmem:[#allocation2 + $0x80] sm:$0xff]
  %v436 = vld [vmem:[#allocation2 + $0x88] sm:$0xff]
  %v437 = vld [vmem:[#allocation2 + $0x90] sm:$0xff]
  %v438 = vld [vmem:[#allocation2 + $0x98] sm:$0xff]
  %vm439 = vcmask 326656
  %v441 = vsel %vm439, %v418, 0
  %443 = vmatpush.msra.mxu0 0.0
  %444 = vmatpush.msra.mxu0 0.0
  %445 = vmatpush.msra.mxu0 0.0
  %446 = vmatpush.msra.mxu0 0.0
  %447 = vmatpush.msra.mxu0 0.0
  %448 = vmatpush.msra.mxu0 0.0
  %449 = vmatpush.msra.mxu0 0.0
  %450 = vmatpush.msra.mxu0 0.0
  %451 = vmatpush.msra.mxu0 0.0
  %452 = vmatpush.msra.mxu0 0.0
  %453 = vmatpush.msra.mxu0 0.0
  %454 = vmatpush.msra.mxu0 %v435
  %455 = vmatpush.msra.mxu0 %v431
  %456 = vmatpush.msra.mxu0 %v427
  %457 = vmatpush.msra.mxu0 %v423
  %458 = vmatpush.msra.mxu0 %v419
  %459 = vmatmul.f32.gmra.mxu0 %v441
  %v460 = vpop.f32.mrf.mxu0
  %v461 = vadd.f32 0.0, %v460
  %462 = vdwg.mxu0
  %463 = vmatpush.msra.mxu0 0.0
  %464 = vmatpush.msra.mxu0 0.0
  %465 = vmatpush.msra.mxu0 0.0
  %466 = vmatpush.msra.mxu0 0.0
  %467 = vmatpush.msra.mxu0 0.0
  %468 = vmatpush.msra.mxu0 0.0
  %469 = vmatpush.msra.mxu0 0.0
  %470 = vmatpush.msra.mxu0 0.0
  %471 = vmatpush.msra.mxu0 0.0
  %472 = vmatpush.msra.mxu0 0.0
  %473 = vmatpush.msra.mxu0 0.0
  %474 = vmatpush.msra.mxu0 %v436
  %475 = vmatpush.msra.mxu0 %v432
  %476 = vmatpush.msra.mxu0 %v428
  %477 = vmatpush.msra.mxu0 %v424
  %478 = vmatpush.msra.mxu0 %v420
  %479 = vmatmul.f32.gmra.mxu0 %v441
  %v480 = vpop.f32.mrf.mxu0
  %v481 = vadd.f32 0.0, %v480
  %482 = vdwg.mxu0
  %483 = vmatpush.msra.mxu0 0.0
  %484 = vmatpush.msra.mxu0 0.0
  %485 = vmatpush.msra.mxu0 0.0
  %486 = vmatpush.msra.mxu0 0.0
  %487 = vmatpush.msra.mxu0 0.0
  %488 = vmatpush.msra.mxu0 0.0
  %489 = vmatpush.msra.mxu0 0.0
  %490 = vmatpush.msra.mxu0 0.0
  %491 = vmatpush.msra.mxu0 0.0
  %492 = vmatpush.msra.mxu0 0.0
  %493 = vmatpush.msra.mxu0 0.0
  %494 = vmatpush.msra.mxu0 %v437
  %495 = vmatpush.msra.mxu0 %v433
  %496 = vmatpush.msra.mxu0 %v429
  %497 = vmatpush.msra.mxu0 %v425
  %498 = vmatpush.msra.mxu0 %v421
  %499 = vmatmul.f32.gmra.mxu0 %v441
  %v500 = vpop.f32.mrf.mxu0
  %v501 = vadd.f32 0.0, %v500
  %502 = vdwg.mxu0
  %503 = vmatpush.msra.mxu0 0.0
  %504 = vmatpush.msra.mxu0 0.0
  %505 = vmatpush.msra.mxu0 0.0
  %506 = vmatpush.msra.mxu0 0.0
  %507 = vmatpush.msra.mxu0 0.0
  %508 = vmatpush.msra.mxu0 0.0
  %509 = vmatpush.msra.mxu0 0.0
  %510 = vmatpush.msra.mxu0 0.0
  %511 = vmatpush.msra.mxu0 0.0
  %512 = vmatpush.msra.mxu0 0.0
  %513 = vmatpush.msra.mxu0 0.0
  %514 = vmatpush.msra.mxu0 %v438
  %515 = vmatpush.msra.mxu0 %v434
  %516 = vmatpush.msra.mxu0 %v430
  %517 = vmatpush.msra.mxu0 %v426
  %518 = vmatpush.msra.mxu0 %v422
  %519 = vmatmul.f32.gmra.mxu0 %v441
  %v520 = vpop.f32.mrf.mxu0
  %v521 = vadd.f32 0.0, %v520
  %522 = vdwg.mxu0
  %vm523 = vcmask 1043456
  %v524 = vsel %vm523, %v461, 0.0
  %v525 = vsel %vm523, %v481, 0.0
  %v526 = vadd.f32 %v524, %v525
  %v527 = vsel %vm523, %v501, 0.0
  %v528 = vadd.f32 %v526, %v527
  %v529 = vsel %vm523, %v521, 0.0
  %v530 = vadd.f32 %v528, %v529
  %531 = vadd.xlane.f32.xlu0 %v530
  %v532 = vpop.xlane.xlu0 %531
  %v533 = vmul.f32 %v532, 0.001953125
  %v534 = vsub.f32 %v461, %v533
  %v535 = vsub.f32 %v481, %v533
  %v536 = vsub.f32 %v501, %v533
  %v537 = vsub.f32 %v521, %v533
  %v538 = vmul.f32 %v534, %v534
  %v539 = vmul.f32 %v535, %v535
  %v540 = vmul.f32 %v536, %v536
  %v541 = vmul.f32 %v537, %v537
  %v542 = vsel %vm523, %v538, 0.0
  %v543 = vsel %vm523, %v539, 0.0
  %v544 = vadd.f32 %v542, %v543
  %v545 = vsel %vm523, %v540, 0.0
  %v546 = vadd.f32 %v544, %v545
  %v547 = vsel %vm523, %v541, 0.0
  %v548 = vadd.f32 %v546, %v547
  %549 = vadd.xlane.f32.xlu0 %v548
  %v550 = vpop.xlane.xlu0 %549
  %v551 = vmul.f32 %v550, 0.001953125
  %v552 = vadd.f32 %v551, 1e-05
  %v553 = vrsqrt.pop %v552
  %v554 = vmul.f32 %v553, %v552
  %v555 = vmul.f32 %v554, %v553
  %v556 = vmul.f32 0.5, %v555
  %v557 = vsub.f32 1.5, %v556
  %v558 = vmul.f32 %v553, %v557
  %vm559 = vweird.f32 %v552
  %vm560 = vweird.f32 %v553
  %vm561 = vmor %vm559, %vm560
  %v562 = vsel %vm561, %v553, %v558
  %v563 = vmul.f32 %v55, %v562
  %565 = vset.pattern.permute.xlu0 0
  %566 = vperm.xlu0 %565, %v563
  %v567 = vpop.permute.xlu0 %566
  %v569 = vmul.f32 %v534, %v567
  %v570 = vmul.f32 %v535, %v567
  %v571 = vmul.f32 %v536, %v567
  %v572 = vmul.f32 %v537, %v567
  %574 = vset.pattern.permute.xlu0 1
  %575 = vperm.xlu0 %574, %v55
  %v576 = vpop.permute.xlu0 %575
  %v578 = vadd.f32 %v569, %v576
  %v579 = vadd.f32 %v570, %v576
  %v580 = vadd.f32 %v571, %v576
  %v581 = vadd.f32 %v572, %v576
  %v582 = vmax.f32 %v578, 0.0
  %v583 = vmax.f32 %v579, 0.0
  %v584 = vmax.f32 %v580, 0.0
  %v585 = vmax.f32 %v581, 0.0
  %587 = vrot.lane.b32.xlu0 %v585, 17
  %v588 = vpop.permute.xlu0 %587
  %593 = vrot.lane.b32.xlu0 %v582, 17
  %v594 = vpop.permute.xlu0 %593
  %595 = vrot.lane.b32.xlu0 %v583, 17
  %v596 = vpop.permute.xlu0 %595
  %597 = vrot.lane.b32.xlu0 %v584, 17
  %v598 = vpop.permute.xlu0 %597
  %v599 = vsel %vm65, %v594, %v596
  %v600 = vsel %vm65, %v596, %v598
  %v601 = vsel %vm65, %v598, %v588
  %v606 = vsel %vm65, %v588, %v594
  %v607 = vld [vmem:[%s1] ss:$8 sm:$0xf]
  %v609 = vperm.slane %v607, 0
  %v610 = vperm.slane %v607, 1
  %v611 = vperm.slane %v607, 2
  %v612 = vperm.slane %v607, 3
  %v617 = vmul.f32 %v606, %v609
  %v618 = vmul.f32 %v599, %v610
  %v619 = vmul.f32 %v600, %v611
  %v620 = vmul.f32 %v601, %v612
  %621 = vst [vmem:[#allocation2] sm:$0xf] %v617
  %622 = vst [vmem:[#allocation2 + $0x8] sm:$0xf] %v618
  %623 = vst [vmem:[#allocation2 + $0x10] sm:$0xf] %v619
  %624 = vst [vmem:[#allocation2 + $0x18] sm:$0xf] %v620
  %625 = vrot.lane.b32.xlu0 %v585, 16
  %v626 = vpop.permute.xlu0 %625
  %628 = vrot.lane.b32.xlu0 %v582, 16
  %v629 = vpop.permute.xlu0 %628
  %630 = vrot.lane.b32.xlu0 %v583, 16
  %v631 = vpop.permute.xlu0 %630
  %632 = vrot.lane.b32.xlu0 %v584, 16
  %v633 = vpop.permute.xlu0 %632
  %v634 = vsel %vm101, %v629, %v631
  %v635 = vsel %vm101, %v631, %v633
  %v636 = vsel %vm101, %v633, %v626
  %v641 = vsel %vm101, %v626, %v629
  %v642 = vld [vmem:[%s110] ss:$8 sm:$0xf]
  %v644 = vperm.slane %v642, 0
  %v645 = vperm.slane %v642, 1
  %v646 = vperm.slane %v642, 2
  %v647 = vperm.slane %v642, 3
  %v652 = vmul.f32 %v641, %v644
  %v653 = vmul.f32 %v634, %v645
  %v654 = vmul.f32 %v635, %v646
  %v655 = vmul.f32 %v636, %v647
  %v660 = vrot.slane %v652, 4
  %v661 = vrot.slane %v653, 4
  %v662 = vrot.slane %v654, 4
  %v663 = vrot.slane %v655, 4
  %668 = vst [vmem:[#allocation2] sm:$0xf0] %v660
  %669 = vst [vmem:[#allocation2 + $0x8] sm:$0xf0] %v661
  %670 = vst [vmem:[#allocation2 + $0x10] sm:$0xf0] %v662
  %671 = vst [vmem:[#allocation2 + $0x18] sm:$0xf0] %v663
  %672 = vrot.lane.b32.xlu0 %v585, 15
  %v673 = vpop.permute.xlu0 %672
  %675 = vrot.lane.b32.xlu0 %v582, 15
  %v676 = vpop.permute.xlu0 %675
  %677 = vrot.lane.b32.xlu0 %v583, 15
  %v678 = vpop.permute.xlu0 %677
  %679 = vrot.lane.b32.xlu0 %v584, 15
  %v680 = vpop.permute.xlu0 %679
  %v681 = vsel %vm150, %v676, %v678
  %v682 = vsel %vm150, %v678, %v680
  %v683 = vsel %vm150, %v680, %v673
  %v688 = vsel %vm150, %v673, %v676
  %v689 = vld [vmem:[%s159] ss:$8 sm:$0xf]
  %v691 = vperm.slane %v689, 0
  %v692 = vperm.slane %v689, 1
  %v693 = vperm.slane %v689, 2
  %v694 = vperm.slane %v689, 3
  %v699 = vmul.f32 %v688, %v691
  %v700 = vmul.f32 %v681, %v692
  %v701 = vmul.f32 %v682, %v693
  %v702 = vmul.f32 %v683, %v694
  %703 = vst [vmem:[#allocation2 + $0x20] sm:$0xf] %v699
  %704 = vst [vmem:[#allocation2 + $0x28] sm:$0xf] %v700
  %705 = vst [vmem:[#allocation2 + $0x30] sm:$0xf] %v701
  %706 = vst [vmem:[#allocation2 + $0x38] sm:$0xf] %v702
  %707 = vrot.lane.b32.xlu0 %v585, 1
  %v708 = vpop.permute.xlu0 %707
  %710 = vrot.lane.b32.xlu0 %v582, 1
  %v711 = vpop.permute.xlu0 %710
  %712 = vrot.lane.b32.xlu0 %v583, 1
  %v713 = vpop.permute.xlu0 %712
  %714 = vrot.lane.b32.xlu0 %v584, 1
  %v715 = vpop.permute.xlu0 %714
  %v716 = vsel %vm187, %v711, %v713
  %v717 = vsel %vm187, %v713, %v715
  %v718 = vsel %vm187, %v715, %v708
  %v723 = vsel %vm187, %v708, %v711
  %v724 = vld [vmem:[%s196] ss:$8 sm:$0xf]
  %v726 = vperm.slane %v724, 0
  %v727 = vperm.slane %v724, 1
  %v728 = vperm.slane %v724, 2
  %v729 = vperm.slane %v724, 3
  %v734 = vmul.f32 %v723, %v726
  %v735 = vmul.f32 %v716, %v727
  %v736 = vmul.f32 %v717, %v728
  %v737 = vmul.f32 %v718, %v729
  %v742 = vrot.slane %v734, 4
  %v743 = vrot.slane %v735, 4
  %v744 = vrot.slane %v736, 4
  %v745 = vrot.slane %v737, 4
  %750 = vst [vmem:[#allocation2 + $0x20] sm:$0xf0] %v742
  %751 = vst [vmem:[#allocation2 + $0x28] sm:$0xf0] %v743
  %752 = vst [vmem:[#allocation2 + $0x30] sm:$0xf0] %v744
  %753 = vst [vmem:[#allocation2 + $0x38] sm:$0xf0] %v745
  %v754 = vld [vmem:[%s227] ss:$8 sm:$0xf]
  %v756 = vperm.slane %v754, 0
  %v757 = vperm.slane %v754, 1
  %v758 = vperm.slane %v754, 2
  %v759 = vperm.slane %v754, 3
  %v764 = vmul.f32 %v582, %v756
  %v765 = vmul.f32 %v583, %v757
  %v766 = vmul.f32 %v584, %v758
  %v767 = vmul.f32 %v585, %v759
  %768 = vst [vmem:[#allocation2 + $0x40] sm:$0xf] %v764
  %769 = vst [vmem:[#allocation2 + $0x48] sm:$0xf] %v765
  %770 = vst [vmem:[#allocation2 + $0x50] sm:$0xf] %v766
  %771 = vst [vmem:[#allocation2 + $0x58] sm:$0xf] %v767
  %772 = vrot.lane.b32.xlu0 %v582, 127
  %v773 = vpop.permute.xlu0 %772
  %774 = vrot.lane.b32.xlu0 %v583, 127
  %v775 = vpop.permute.xlu0 %774
  %776 = vrot.lane.b32.xlu0 %v584, 127
  %v777 = vpop.permute.xlu0 %776
  %778 = vrot.lane.b32.xlu0 %v585, 127
  %v779 = vpop.permute.xlu0 %778
  %v780 = vsel %vm254, %v773, %v775
  %v781 = vsel %vm254, %v775, %v777
  %v782 = vsel %vm254, %v777, %v779
  %v788 = vsel %vm254, %v779, %v773
  %v789 = vld [vmem:[%s264] ss:$8 sm:$0xf]
  %v791 = vperm.slane %v789, 0
  %v792 = vperm.slane %v789, 1
  %v793 = vperm.slane %v789, 2
  %v794 = vperm.slane %v789, 3
  %v799 = vmul.f32 %v780, %v791
  %v800 = vmul.f32 %v781, %v792
  %v801 = vmul.f32 %v782, %v793
  %v802 = vmul.f32 %v788, %v794
  %v807 = vrot.slane %v799, 4
  %v808 = vrot.slane %v800, 4
  %v809 = vrot.slane %v801, 4
  %v810 = vrot.slane %v802, 4
  %815 = vst [vmem:[#allocation2 + $0x40] sm:$0xf0] %v807
  %816 = vst [vmem:[#allocation2 + $0x48] sm:$0xf0] %v808
  %817 = vst [vmem:[#allocation2 + $0x50] sm:$0xf0] %v809
  %818 = vst [vmem:[#allocation2 + $0x58] sm:$0xf0] %v810
  %819 = vrot.lane.b32.xlu0 %v582, 113
  %v820 = vpop.permute.xlu0 %819
  %821 = vrot.lane.b32.xlu0 %v583, 113
  %v822 = vpop.permute.xlu0 %821
  %823 = vrot.lane.b32.xlu0 %v584, 113
  %v824 = vpop.permute.xlu0 %823
  %825 = vrot.lane.b32.xlu0 %v585, 113
  %v826 = vpop.permute.xlu0 %825
  %v827 = vsel %vm303, %v820, %v822
  %v828 = vsel %vm303, %v822, %v824
  %v829 = vsel %vm303, %v824, %v826
  %v835 = vsel %vm303, %v826, %v820
  %v836 = vld [vmem:[%s313] ss:$8 sm:$0xf]
  %v838 = vperm.slane %v836, 0
  %v839 = vperm.slane %v836, 1
  %v840 = vperm.slane %v836, 2
  %v841 = vperm.slane %v836, 3
  %v846 = vmul.f32 %v827, %v838
  %v847 = vmul.f32 %v828, %v839
  %v848 = vmul.f32 %v829, %v840
  %v849 = vmul.f32 %v835, %v841
  %850 = vst [vmem:[#allocation2 + $0x60] sm:$0xf] %v846
  %851 = vst [vmem:[#allocation2 + $0x68] sm:$0xf] %v847
  %852 = vst [vmem:[#allocation2 + $0x70] sm:$0xf] %v848
  %853 = vst [vmem:[#allocation2 + $0x78] sm:$0xf] %v849
  %854 = vrot.lane.b32.xlu0 %v582, 112
  %v855 = vpop.permute.xlu0 %854
  %856 = vrot.lane.b32.xlu0 %v583, 112
  %v857 = vpop.permute.xlu0 %856
  %858 = vrot.lane.b32.xlu0 %v584, 112
  %v859 = vpop.permute.xlu0 %858
  %860 = vrot.lane.b32.xlu0 %v585, 112
  %v861 = vpop.permute.xlu0 %860
  %v862 = vsel %vm340, %v855, %v857
  %v863 = vsel %vm340, %v857, %v859
  %v864 = vsel %vm340, %v859, %v861
  %v870 = vsel %vm340, %v861, %v855
  %v871 = vld [vmem:[%s350] ss:$8 sm:$0xf]
  %v873 = vperm.slane %v871, 0
  %v874 = vperm.slane %v871, 1
  %v875 = vperm.slane %v871, 2
  %v876 = vperm.slane %v871, 3
  %v881 = vmul.f32 %v862, %v873
  %v882 = vmul.f32 %v863, %v874
  %v883 = vmul.f32 %v864, %v875
  %v884 = vmul.f32 %v870, %v876
  %v889 = vrot.slane %v881, 4
  %v890 = vrot.slane %v882, 4
  %v891 = vrot.slane %v883, 4
  %v892 = vrot.slane %v884, 4
  %897 = vst [vmem:[#allocation2 + $0x60] sm:$0xf0] %v889
  %898 = vst [vmem:[#allocation2 + $0x68] sm:$0xf0] %v890
  %899 = vst [vmem:[#allocation2 + $0x70] sm:$0xf0] %v891
  %900 = vst [vmem:[#allocation2 + $0x78] sm:$0xf0] %v892
  %901 = vrot.lane.b32.xlu0 %v582, 111
  %v902 = vpop.permute.xlu0 %901
  %903 = vrot.lane.b32.xlu0 %v583, 111
  %v904 = vpop.permute.xlu0 %903
  %905 = vrot.lane.b32.xlu0 %v584, 111
  %v906 = vpop.permute.xlu0 %905
  %907 = vrot.lane.b32.xlu0 %v585, 111
  %v908 = vpop.permute.xlu0 %907
  %v909 = vsel %vm389, %v902, %v904
  %v910 = vsel %vm389, %v904, %v906
  %v911 = vsel %vm389, %v906, %v908
  %v917 = vsel %vm389, %v908, %v902
  %v918 = vld [vmem:[%s399] ss:$8 sm:$0xf]
  %v920 = vperm.slane %v918, 0
  %v921 = vperm.slane %v918, 1
  %v922 = vperm.slane %v918, 2
  %v923 = vperm.slane %v918, 3
  %v928 = vmul.f32 %v909, %v920
  %v929 = vmul.f32 %v910, %v921
  %v930 = vmul.f32 %v911, %v922
  %v931 = vmul.f32 %v917, %v923
  %932 = vst [vmem:[#allocation2 + $0x80] sm:$0xf] %v928
  %933 = vst [vmem:[#allocation2 + $0x88] sm:$0xf] %v929
  %934 = vst [vmem:[#allocation2 + $0x90] sm:$0xf] %v930
  %935 = vst [vmem:[#allocation2 + $0x98] sm:$0xf] %v931
  %v936 = vld [vmem:[%s3] sm:$0xff]
  %v937 = vld [vmem:[#allocation2] sm:$0xff]
  %v938 = vld [vmem:[#allocation2 + $0x8] sm:$0xff]
  %v939 = vld [vmem:[#allocation2 + $0x10] sm:$0xff]
  %v940 = vld [vmem:[#allocation2 + $0x18] sm:$0xff]
  %v941 = vld [vmem:[#allocation2 + $0x20] sm:$0xff]
  %v942 = vld [vmem:[#allocation2 + $0x28] sm:$0xff]
  %v943 = vld [vmem:[#allocation2 + $0x30] sm:$0xff]
  %v944 = vld [vmem:[#allocation2 + $0x38] sm:$0xff]
  %v945 = vld [vmem:[#allocation2 + $0x40] sm:$0xff]
  %v946 = vld [vmem:[#allocation2 + $0x48] sm:$0xff]
  %v947 = vld [vmem:[#allocation2 + $0x50] sm:$0xff]
  %v948 = vld [vmem:[#allocation2 + $0x58] sm:$0xff]
  %v949 = vld [vmem:[#allocation2 + $0x60] sm:$0xff]
  %v950 = vld [vmem:[#allocation2 + $0x68] sm:$0xff]
  %v951 = vld [vmem:[#allocation2 + $0x70] sm:$0xff]
  %v952 = vld [vmem:[#allocation2 + $0x78] sm:$0xff]
  %v953 = vld [vmem:[#allocation2 + $0x80] sm:$0xff]
  %v954 = vld [vmem:[#allocation2 + $0x88] sm:$0xff]
  %v955 = vld [vmem:[#allocation2 + $0x90] sm:$0xff]
  %v956 = vld [vmem:[#allocation2 + $0x98] sm:$0xff]
  %v958 = vsel %vm439, %v936, 0
  %960 = vmatpush.msra.mxu0 0.0
  %961 = vmatpush.msra.mxu0 0.0
  %962 = vmatpush.msra.mxu0 0.0
  %963 = vmatpush.msra.mxu0 0.0
  %964 = vmatpush.msra.mxu0 0.0
  %965 = vmatpush.msra.mxu0 0.0
  %966 = vmatpush.msra.mxu0 0.0
  %967 = vmatpush.msra.mxu0 0.0
  %968 = vmatpush.msra.mxu0 0.0
  %969 = vmatpush.msra.mxu0 0.0
  %970 = vmatpush.msra.mxu0 0.0
  %971 = vmatpush.msra.mxu0 %v953
  %972 = vmatpush.msra.mxu0 %v949
  %973 = vmatpush.msra.mxu0 %v945
  %974 = vmatpush.msra.mxu0 %v941
  %975 = vmatpush.msra.mxu0 %v937
  %976 = vmatmul.f32.gmra.mxu0 %v958
  %v977 = vpop.f32.mrf.mxu0
  %v978 = vadd.f32 0.0, %v977
  %979 = vdwg.mxu0
  %980 = vmatpush.msra.mxu0 0.0
  %981 = vmatpush.msra.mxu0 0.0
  %982 = vmatpush.msra.mxu0 0.0
  %983 = vmatpush.msra.mxu0 0.0
  %984 = vmatpush.msra.mxu0 0.0
  %985 = vmatpush.msra.mxu0 0.0
  %986 = vmatpush.msra.mxu0 0.0
  %987 = vmatpush.msra.mxu0 0.0
  %988 = vmatpush.msra.mxu0 0.0
  %989 = vmatpush.msra.mxu0 0.0
  %990 = vmatpush.msra.mxu0 0.0
  %991 = vmatpush.msra.mxu0 %v954
  %992 = vmatpush.msra.mxu0 %v950
  %993 = vmatpush.msra.mxu0 %v946
  %994 = vmatpush.msra.mxu0 %v942
  %995 = vmatpush.msra.mxu0 %v938
  %996 = vmatmul.f32.gmra.mxu0 %v958
  %v997 = vpop.f32.mrf.mxu0
  %v998 = vadd.f32 0.0, %v997
  %999 = vdwg.mxu0
  %1000 = vmatpush.msra.mxu0 0.0
  %1001 = vmatpush.msra.mxu0 0.0
  %1002 = vmatpush.msra.mxu0 0.0
  %1003 = vmatpush.msra.mxu0 0.0
  %1004 = vmatpush.msra.mxu0 0.0
  %1005 = vmatpush.msra.mxu0 0.0
  %1006 = vmatpush.msra.mxu0 0.0
  %1007 = vmatpush.msra.mxu0 0.0
  %1008 = vmatpush.msra.mxu0 0.0
  %1009 = vmatpush.msra.mxu0 0.0
  %1010 = vmatpush.msra.mxu0 0.0
  %1011 = vmatpush.msra.mxu0 %v955
  %1012 = vmatpush.msra.mxu0 %v951
  %1013 = vmatpush.msra.mxu0 %v947
  %1014 = vmatpush.msra.mxu0 %v943
  %1015 = vmatpush.msra.mxu0 %v939
  %1016 = vmatmul.f32.gmra.mxu0 %v958
  %v1017 = vpop.f32.mrf.mxu0
  %v1018 = vadd.f32 0.0, %v1017
  %1019 = vdwg.mxu0
  %1020 = vmatpush.msra.mxu0 0.0
  %1021 = vmatpush.msra.mxu0 0.0
  %1022 = vmatpush.msra.mxu0 0.0
  %1023 = vmatpush.msra.mxu0 0.0
  %1024 = vmatpush.msra.mxu0 0.0
  %1025 = vmatpush.msra.mxu0 0.0
  %1026 = vmatpush.msra.mxu0 0.0
  %1027 = vmatpush.msra.mxu0 0.0
  %1028 = vmatpush.msra.mxu0 0.0
  %1029 = vmatpush.msra.mxu0 0.0
  %1030 = vmatpush.msra.mxu0 0.0
  %1031 = vmatpush.msra.mxu0 %v956
  %1032 = vmatpush.msra.mxu0 %v952
  %1033 = vmatpush.msra.mxu0 %v948
  %1034 = vmatpush.msra.mxu0 %v944
  %1035 = vmatpush.msra.mxu0 %v940
  %1036 = vmatmul.f32.gmra.mxu0 %v958
  %v1037 = vpop.f32.mrf.mxu0
  %v1038 = vadd.f32 0.0, %v1037
  %1039 = vdwg.mxu0
  %v1040 = vsel %vm523, %v978, 0.0
  %v1041 = vsel %vm523, %v998, 0.0
  %v1042 = vadd.f32 %v1040, %v1041
  %v1043 = vsel %vm523, %v1018, 0.0
  %v1044 = vadd.f32 %v1042, %v1043
  %v1045 = vsel %vm523, %v1038, 0.0
  %v1046 = vadd.f32 %v1044, %v1045
  %1047 = vadd.xlane.f32.xlu0 %v1046
  %v1048 = vpop.xlane.xlu0 %1047
  %v1049 = vmul.f32 %v1048, 0.001953125
  %v1050 = vsub.f32 %v978, %v1049
  %v1051 = vsub.f32 %v998, %v1049
  %v1052 = vsub.f32 %v1018, %v1049
  %v1053 = vsub.f32 %v1038, %v1049
  %v1054 = vmul.f32 %v1050, %v1050
  %v1055 = vmul.f32 %v1051, %v1051
  %v1056 = vmul.f32 %v1052, %v1052
  %v1057 = vmul.f32 %v1053, %v1053
  %v1058 = vsel %vm523, %v1054, 0.0
  %v1059 = vsel %vm523, %v1055, 0.0
  %v1060 = vadd.f32 %v1058, %v1059
  %v1061 = vsel %vm523, %v1056, 0.0
  %v1062 = vadd.f32 %v1060, %v1061
  %v1063 = vsel %vm523, %v1057, 0.0
  %v1064 = vadd.f32 %v1062, %v1063
  %1065 = vadd.xlane.f32.xlu0 %v1064
  %v1066 = vpop.xlane.xlu0 %1065
  %v1067 = vmul.f32 %v1066, 0.001953125
  %v1068 = vadd.f32 %v1067, 1e-05
  %v1069 = vrsqrt.pop %v1068
  %v1070 = vmul.f32 %v1069, %v1068
  %v1071 = vmul.f32 %v1070, %v1069
  %v1072 = vmul.f32 0.5, %v1071
  %v1073 = vsub.f32 1.5, %v1072
  %v1074 = vmul.f32 %v1069, %v1073
  %vm1075 = vweird.f32 %v1068
  %vm1076 = vweird.f32 %v1069
  %vm1077 = vmor %vm1075, %vm1076
  %v1078 = vsel %vm1077, %v1069, %v1074
  %v1079 = vmul.f32 %v55, %v1078
  %1081 = vset.pattern.permute.xlu0 2
  %1082 = vperm.xlu0 %1081, %v1079
  %v1083 = vpop.permute.xlu0 %1082
  %v1085 = vmul.f32 %v1050, %v1083
  %v1086 = vmul.f32 %v1051, %v1083
  %v1087 = vmul.f32 %v1052, %v1083
  %v1088 = vmul.f32 %v1053, %v1083
  %1089 = vset.pattern.permute.xlu0 3
  %1090 = vperm.xlu0 %1089, %v55
  %v1091 = vpop.permute.xlu0 %1090
  %v1093 = vadd.f32 %v1085, %v1091
  %v1094 = vadd.f32 %v1086, %v1091
  %v1095 = vadd.f32 %v1087, %v1091
  %v1096 = vadd.f32 %v1088, %v1091
  %v1097 = vadd.f32 %v1093, %v25
  %v1098 = vadd.f32 %v1094, %v26
  %v1099 = vadd.f32 %v1095, %v31
  %v1100 = vadd.f32 %v1096, %v32
  %v1101 = vmax.f32 %v1097, 0.0
  %v1102 = vmax.f32 %v1098, 0.0
  %v1103 = vmax.f32 %v1099, 0.0
  %v1104 = vmax.f32 %v1100, 0.0
  %v1107 = vrot.slane %v1102, 4
  %v1108 = vsel %vm523, %v1101, %v1107
  %1110 = vst [vmem:[%s5] sm:$0xff] %v1108
  %v1113 = vrot.slane %v1104, 4
  %v1114 = vsel %vm523, %v1103, %v1113
  %s1116 = scalar_lea.vmem %s5, 8
  %1117 = vst [vmem:[%s1116] sm:$0xff] %v1114
  // Predicated region
  $region22: #{basic_block_forward.1} parent=0 // pred_check
    _
  $region23: #{basic_block_forward.1} parent=0 // pred_check_branch
    %1119 = sbr.rel (0) target = $region25
  $region24: #{basic_block_forward.1} parent=0 // pred_region
    _
  $region25: #{basic_block_forward.1} parent=0 // pred_fallthru
    _
  // Predicated region
  $region26: #{basic_block_forward.1} parent=0 // pred_check
    _
  $region27: #{basic_block_forward.1} parent=0 // pred_check_branch
    %1121 = sbr.rel (0) target = $region29
  $region28: #{basic_block_forward.1} parent=0 // pred_region
    _
  $region29: #{basic_block_forward.1} parent=0 // pred_fallthru
    _

</llo_original>
